<compile_context>
chip_gen: v6e
topology: v6e:2x2x1
jax: 0.10.0
libtpu: 0.0.40
codegen_flags: <defaults>
</compile_context>

<pallas_src>
import functools

import jax
import jax.numpy as jnp
from jax import lax
from jax.experimental import pallas as pl
from jax.experimental.pallas import tpu as pltpu

MIN_NORM = 1e-15
BALL_EPS = 4e-3             # geoopt BALL_EPS[float32]
MAX_NORM = 1.0 - BALL_EPS   # curvature c = 1.0 (geoopt default)


# ---------- Poincare-ball math (matches geoopt.manifolds.stereographic.math, c=1) ----

def _artanh(x):
    x = jnp.clip(x, -1.0 + 1e-7, 1.0 - 1e-7)
    return 0.5 * (jnp.log1p(x) - jnp.log1p(-x))


def _norm(x):
    return jnp.maximum(jnp.sqrt(jnp.sum(x * x, axis=-1, keepdims=True)), MIN_NORM)


def _project(x):
    n = _norm(x)
    return jnp.where(n > MAX_NORM, x / n * MAX_NORM, x)


def _mobius_add(x, y):
    x2 = jnp.sum(x * x, axis=-1, keepdims=True)
    y2 = jnp.sum(y * y, axis=-1, keepdims=True)
    xy = jnp.sum(x * y, axis=-1, keepdims=True)
    num = (1.0 + 2.0 * xy + y2) * x + (1.0 - x2) * y
    den = 1.0 + 2.0 * xy + x2 * y2
    return num / jnp.maximum(den, MIN_NORM)


def _add_project(x, y):
    return _project(_mobius_add(x, y))


def _finish_matvec(mx, xn):
    """Finish mobius_matvec given mx = x @ M^T and xn = ||x||, with fused project.

    ||result|| == |tanh(...)| analytically, so the projection reuses that scalar
    instead of doing a fresh cross-lane reduction.
    """
    mxn = _norm(mx)
    res_n = jnp.tanh(mxn / xn * _artanh(xn))          # >= 0, equals ||res||
    res = res_n * (mx / mxn)
    res = jnp.where(res_n > MAX_NORM,
                    res * (MAX_NORM / jnp.maximum(res_n, MIN_NORM)), res)
    zero = jnp.max(jnp.abs(mx), axis=-1, keepdims=True) == 0.0
    return jnp.where(zero, 0.0, res)


def _matvec_project(x, m_t):
    """project(mobius_matvec(M, x)) with pre-transposed m_t = M^T."""
    xn = _norm(x)
    mx = jnp.dot(x, m_t, preferred_element_type=jnp.float32)   # MXU hot path
    return _finish_matvec(mx, xn)


def _matvec2_project(x, m2_t):
    """Two fused mobius_matvecs sharing x: m2_t = [Ma^T | Mb^T] of shape (H, 2H)."""
    split = m2_t.shape[-1] // 2
    xn = _norm(x)
    mx = jnp.dot(x, m2_t, preferred_element_type=jnp.float32)  # one wide MXU op
    return _finish_matvec(mx[:, :split], xn), _finish_matvec(mx[:, split:], xn)


def _pointwise_mul_project(w, x):
    """project(mobius_pointwise_mul(w, x)); geoopt takes norms w.r.t. x."""
    xn = _norm(x)
    wx = w * x
    wxn = _norm(wx)
    res_n = jnp.tanh(wxn / xn * _artanh(xn))
    res = res_n * (wx / wxn)
    res = jnp.where(res_n > MAX_NORM,
                    res * (MAX_NORM / jnp.maximum(res_n, MIN_NORM)), res)
    zero = jnp.max(jnp.abs(wx), axis=-1, keepdims=True) == 0.0
    return jnp.where(zero, 0.0, res)


def _logmap0(y):
    yn = _norm(y)
    return y / yn * _artanh(yn)


# ---------- HyperGRUCell step (shared by kernel and pure-JAX reference) -------------

def _cell_step(h, uxz, uxr, wzr_t, wh_t, bz, br, bh, mask):
    # Fused W_z / W_r matvec (shared input h), each followed by project().
    wh_z, wh_r = _matvec2_project(h, wzr_t)
    z = jax.nn.sigmoid(_logmap0(_add_project(_add_project(wh_z, uxz), bz)))
    r = jax.nn.sigmoid(_logmap0(_add_project(_add_project(wh_r, uxr), br)))
    if mask is not None:           # zero padded lanes so cross-lane norms stay exact
        z = z * mask
        r = r * mask
    r_point_h = _pointwise_mul_project(h, r)
    wh_h = _matvec_project(r_point_h, wh_t)
    # NOTE: reproduces the original PyTorch code, which uses u_r (not u_h) here.
    h_tilde = _add_project(_add_project(wh_h, uxr), bh)
    mhoh = _add_project(-h, h_tilde)
    return _add_project(h, _pointwise_mul_project(mhoh, z))


# ---------- Pallas kernel 1: parallel input projections  U_z(x), U_r(x) -------------

def _input_proj_kernel(x_ref, uzr_ref, o_ref):
    x = x_ref[...]                                             # (RB, Hp)
    xn = _norm(x)
    mx = jnp.dot(x, uzr_ref[...], preferred_element_type=jnp.float32)  # (RB, 2Hp)
    hp = x.shape[-1]
    o_ref[...] = jnp.concatenate(
        [_finish_matvec(mx[:, :hp], xn), _finish_matvec(mx[:, hp:], xn)], axis=-1)


# ---------- Pallas kernel 2: sequential recurrence over time chunks -----------------

def _hyper_gru_kernel(ux_ref, wzr_ref, wh_ref, bz_ref, br_ref, bh_ref,
                      out_ref, h_scratch, *, h_logical, h_pad, tt):
    @pl.when(pl.program_id(1) == 0)     # first time chunk of this batch tile
    def _():
        h_scratch[...] = jnp.zeros_like(h_scratch)   # init_gru_state: zeros

    if h_pad != h_logical:
        col = lax.broadcasted_iota(jnp.int32, (1, h_pad), 1)
        mask = (col < h_logical).astype(jnp.float32)
    else:
        mask = None

    wzr = wzr_ref[...]        # (Hp, 2Hp) resident, pre-transposed [w_z^T | w_r^T]
    wh = wh_ref[...]          # (Hp, Hp)  resident, pre-transposed w_h^T
    bz = bz_ref[...]
    br = br_ref[...]
    bh = bh_ref[...]

    def body(s, h):
        ux = ux_ref[s]                      # (TB, 2Hp): [U_z(x_t) | U_r(x_t)]
        uxz = ux[:, :h_pad]
        uxr = ux[:, h_pad:]
        new_h = _cell_step(h, uxz, uxr, wzr, wh, bz, br, bh, mask)
        out_ref[s] = new_h
        return new_h

    h_final = lax.fori_loop(0, tt, body, h_scratch[...], unroll=True)
    h_scratch[...] = h_final


# ---------- public wrapper -----------------------------------------------------------

def _ceil_to(n, m):
    return ((n + m - 1) // m) * m


def _pad2(a, rows, cols):
    return jnp.pad(a, ((0, rows - a.shape[0]), (0, cols - a.shape[1])))


def hyper_gru(inputs, params, *, time_chunk=8):
    """inputs: (B, T, H) batch-major float32 -> outputs (B, T, H)."""
    inputs = inputs.astype(jnp.float32)
    B, T, H = inputs.shape
    Bp = _ceil_to(B, 8)            # sublane-dense batch
    Hp = _ceil_to(H, 128)          # lane-dense hidden dim
    TT = max(1, min(time_chunk, T))
    Tp = _ceil_to(T, TT)

    # time-major, zero-padded activations
    x_tm = jnp.transpose(inputs, (1, 0, 2))
    x_tm = jnp.pad(x_tm, ((0, Tp - T), (0, Bp - B), (0, Hp - H)))

    # Loop-invariant weight prep (once, outside the kernels): pad, transpose, fuse.
    wzr_t = jnp.concatenate([_pad2(params["w_z"], Hp, Hp).T,
                             _pad2(params["w_r"], Hp, Hp).T], axis=1)   # (Hp, 2Hp)
    wh_t = _pad2(params["w_h"], Hp, Hp).T                               # (Hp, Hp)
    uzr_t = jnp.concatenate([_pad2(params["u_z"], Hp, Hp).T,
                             _pad2(params["u_r"], Hp, Hp).T], axis=1)   # (Hp, 2Hp)
    # params["u_h"] is intentionally unused (original module uses u_r for h_tilde).
    bz = _pad2(params["b_z"], 1, Hp)
    br = _pad2(params["b_r"], 1, Hp)
    bh = _pad2(params["b_h"], 1, Hp)

    # Batch tiling: 2 tiles when possible so v7x can shard the batch over its 2 TCs.
    nb = 2 if (Bp >= 16 and Bp % 16 == 0) else 1
    TB = Bp // nb

    # Explicit VMEM budget (resident weights + double-buffered IO + scratch), v7x-safe.
    est = 4 * (2 * (Hp * 2 * Hp + Hp * Hp + 3 * Hp)
               + 2 * TT * TB * 3 * Hp
               + TB * Hp)
    vmem_limit = int(min(max(est + (8 << 20), 32 << 20), 64 << 20))

    # ---- pass 1: hoisted input projections, fully parallel over time ----
    rows = Tp * Bp
    rb = TT * Bp
    x2d = x_tm.reshape(rows, Hp)
    ux2d = pl.pallas_call(
        _input_proj_kernel,
        out_shape=jax.ShapeDtypeStruct((rows, 2 * Hp), jnp.float32),
        grid_spec=pltpu.PrefetchScalarGridSpec(
            num_scalar_prefetch=0,
            grid=(rows // rb,),
            in_specs=[pl.BlockSpec((rb, Hp), lambda i: (i, 0)),
                      pl.BlockSpec((Hp, 2 * Hp), lambda i: (0, 0))],
            out_specs=pl.BlockSpec((rb, 2 * Hp), lambda i: (i, 0)),
        ),
        compiler_params=pltpu.CompilerParams(
            dimension_semantics=("parallel",),
            vmem_limit_bytes=vmem_limit),
    )(x2d, uzr_t)
    ux = ux2d.reshape(Tp, Bp, 2 * Hp)

    # ---- pass 2: sequential recurrence (time chunked, batch parallel) ----
    kernel = functools.partial(_hyper_gru_kernel, h_logical=H, h_pad=Hp, tt=TT)
    resident = lambda b, t: (0, 0)
    out_tm = pl.pallas_call(
        kernel,
        out_shape=jax.ShapeDtypeStruct((Tp, Bp, Hp), jnp.float32),
        grid_spec=pltpu.PrefetchScalarGridSpec(
            num_scalar_prefetch=0,
            grid=(nb, Tp // TT),
            in_specs=[pl.BlockSpec((TT, TB, 2 * Hp), lambda b, t: (t, b, 0)),
                      pl.BlockSpec((Hp, 2 * Hp), resident),
                      pl.BlockSpec((Hp, Hp), resident),
                      pl.BlockSpec((1, Hp), resident),
                      pl.BlockSpec((1, Hp), resident),
                      pl.BlockSpec((1, Hp), resident)],
            out_specs=pl.BlockSpec((TT, TB, Hp), lambda b, t: (t, b, 0)),
            scratch_shapes=[pltpu.VMEM((TB, Hp), jnp.float32)],
        ),
        compiler_params=pltpu.CompilerParams(
            dimension_semantics=("parallel", "arbitrary"),
            vmem_limit_bytes=vmem_limit),
    )(ux, wzr_t, wh_t, bz, br, bh)

    return jnp.transpose(out_tm[:T, :B, :H], (1, 0, 2))   # back to (B, T, H)


# ---------- pure-JAX reference (same math, lax.scan, unpadded) ----------------------

def hyper_gru_ref(inputs, params):
    inputs = inputs.astype(jnp.float32)
    B, T, H = inputs.shape
    wzr_t = jnp.concatenate([params["w_z"].T, params["w_r"].T], axis=1)
    uzr_t = jnp.concatenate([params["u_z"].T, params["u_r"].T], axis=1)
    wh_t = params["w_h"].T
    h0 = jnp.zeros((B, H), jnp.float32)

    def step(h, x):
        uxz, uxr = _matvec2_project(x, uzr_t)
        nh = _cell_step(h, uxz, uxr, wzr_t, wh_t,
                        params["b_z"], params["b_r"], params["b_h"], mask=None)
        return nh, nh

    _, ys = lax.scan(step, h0, jnp.transpose(inputs, (1, 0, 2)))
    return jnp.transpose(ys, (1, 0, 2))


# ---------- deterministic parameter init (mirrors HyperGRUCell.__init__) -------------

def init_params(key, hidden_size):
    k = (1.0 / hidden_size) ** 0.5
    ks = jax.random.split(key, 6)
    u = lambda kk, shape: jax.random.uniform(kk, shape, jnp.float32, -k, k)
    H = hidden_size
    return {
        "w_z": u(ks[0], (H, H)),
        "w_r": u(ks[1], (H, H)),
        "w_h": u(ks[2], (H, H)),
        "u_z": u(ks[3], (H, H)),   # input_size == hidden_size in HyperGRU
        "u_r": u(ks[4], (H, H)),
        "u_h": u(ks[5], (H, H)),   # present in the module but unused (original code bug)
        "b_z": jnp.zeros((1, H), jnp.float32),
        "b_r": jnp.zeros((1, H), jnp.float32),
        "b_h": jnp.zeros((1, H), jnp.float32),
    }


if __name__ == "__main__":
    B, T, H = 2, 8, 32
    key = jax.random.PRNGKey(0)
    k_p, k_x = jax.random.split(key)
    params = init_params(k_p, H)
    # small-norm inputs so they lie inside the unit Poincare ball
    x = jax.random.uniform(k_x, (B, T, H), jnp.float32, -0.1, 0.1)

    out = jax.block_until_ready(hyper_gru(x, params))
    ref = jax.block_until_ready(hyper_gru_ref(x, params))

    assert out.shape == (B, T, H), out.shape
    assert bool(jnp.all(jnp.isfinite(out)))
    # loose tolerance: MXU f32 matmul precision differs slightly from XLA reference
    assert bool(jnp.allclose(out, ref, rtol=5e-2, atol=5e-3)), (
        float(jnp.max(jnp.abs(out - ref))))
    print("KERNEL_OK")
</pallas_src>

<mosaic_0001>
module attributes {stable_mosaic.version = 11 : i64} {
  func.func @_input_proj_kernel(%arg0: i32, %arg1: memref<64x128xf32, #tpu.memory_space<vmem>>, %arg2: memref<128x256xf32, #tpu.memory_space<vmem>>, %arg3: memref<64x256xf32, #tpu.memory_space<vmem>>) attributes {dimension_semantics = [#tpu.dimension_semantics<parallel>], iteration_bounds = array<i64: 1>, scalar_prefetch = 0 : i64, scratch_operands = 0 : i64, tpu.core_type = #tpu.core_type<tc>, window_params = [{transform_indices = @transform_0, window_bounds = array<i64: 64, 128>}, {pipeline_mode = #tpu.pipeline_mode<synchronous>, transform_indices = @transform_1, window_bounds = array<i64: 128, 256>}, {transform_indices = @transform_2, window_bounds = array<i64: 64, 256>}]} {
    %c0 = arith.constant 0 : index
    %c0_0 = arith.constant 0 : index
    %0 = vector.load %arg1[%c0, %c0_0] : memref<64x128xf32, #tpu.memory_space<vmem>>, vector<64x128xf32>
    %1 = arith.mulf %0, %0 : vector<64x128xf32>
    %cst = arith.constant dense<0.000000e+00> : vector<64xf32>
    %2 = vector.multi_reduction <add>, %1, %cst [1] : vector<64x128xf32> to vector<64xf32>
    %3 = vector.shape_cast %2 : vector<64xf32> to vector<64x1xf32>
    %4 = math.sqrt %3 : vector<64x1xf32>
    %cst_1 = arith.constant 1.000000e-15 : f32
    %5 = vector.broadcast %cst_1 : f32 to vector<64x1xf32>
    %6 = arith.maximumf %4, %5 : vector<64x1xf32>
    %c0_2 = arith.constant 0 : index
    %c0_3 = arith.constant 0 : index
    %7 = vector.load %arg2[%c0_2, %c0_3] : memref<128x256xf32, #tpu.memory_space<vmem>>, vector<128x256xf32>
    %cst_4 = arith.constant dense<0.000000e+00> : vector<64x256xf32>
    %8 = tpu.matmul %0, %7, %cst_4 {dimension_numbers = #tpu.dot_dimension_numbers<[1], [0], [0], [1], [0, 0, 1, 1], [], []>} : vector<64x128xf32>, vector<128x256xf32>, vector<64x256xf32> -> vector<64x256xf32>
    %9 = vector.extract_strided_slice %8 {offsets = [0, 0], sizes = [64, 128], strides = [1, 1]} : vector<64x256xf32> to vector<64x128xf32>
    %10 = arith.mulf %9, %9 : vector<64x128xf32>
    %cst_5 = arith.constant dense<0.000000e+00> : vector<64xf32>
    %11 = vector.multi_reduction <add>, %10, %cst_5 [1] : vector<64x128xf32> to vector<64xf32>
    %12 = vector.shape_cast %11 : vector<64xf32> to vector<64x1xf32>
    %13 = math.sqrt %12 : vector<64x1xf32>
    %cst_6 = arith.constant 1.000000e-15 : f32
    %14 = vector.broadcast %cst_6 : f32 to vector<64x1xf32>
    %15 = arith.maximumf %13, %14 : vector<64x1xf32>
    %16 = arith.divf %15, %6 : vector<64x1xf32>
    %cst_7 = arith.constant -0.99999988 : f32
    %cst_8 = arith.constant 0.99999988 : f32
    %17 = vector.broadcast %cst_7 : f32 to vector<64x1xf32>
    %18 = arith.maximumf %17, %6 : vector<64x1xf32>
    %19 = vector.broadcast %cst_8 : f32 to vector<64x1xf32>
    %20 = arith.minimumf %19, %18 : vector<64x1xf32>
    %21 = math.log1p %20 : vector<64x1xf32>
    %cst_9 = arith.constant 0.000000e+00 : f32
    %22 = vector.broadcast %cst_9 : f32 to vector<64x1xf32>
    %23 = arith.subf %22, %20 : vector<64x1xf32>
    %24 = math.log1p %23 : vector<64x1xf32>
    %25 = arith.subf %21, %24 : vector<64x1xf32>
    %cst_10 = arith.constant 5.000000e-01 : f32
    %26 = vector.broadcast %cst_10 : f32 to vector<64x1xf32>
    %27 = arith.mulf %26, %25 : vector<64x1xf32>
    %28 = arith.mulf %16, %27 : vector<64x1xf32>
    %29 = math.tanh %28 : vector<64x1xf32>
    %30 = vector.broadcast %15 : vector<64x1xf32> to vector<64x128xf32>
    %31 = arith.divf %9, %30 : vector<64x128xf32>
    %32 = vector.broadcast %29 : vector<64x1xf32> to vector<64x128xf32>
    %33 = arith.mulf %32, %31 : vector<64x128xf32>
    %cst_11 = arith.constant 0.995999991 : f32
    %34 = vector.broadcast %cst_11 : f32 to vector<64x1xf32>
    %35 = arith.cmpf ogt, %29, %34 : vector<64x1xf32>
    %cst_12 = arith.constant 1.000000e-15 : f32
    %36 = vector.broadcast %cst_12 : f32 to vector<64x1xf32>
    %37 = arith.maximumf %29, %36 : vector<64x1xf32>
    %cst_13 = arith.constant 0.995999991 : f32
    %38 = vector.broadcast %cst_13 : f32 to vector<64x1xf32>
    %39 = arith.divf %38, %37 : vector<64x1xf32>
    %40 = vector.broadcast %39 : vector<64x1xf32> to vector<64x128xf32>
    %41 = arith.mulf %33, %40 : vector<64x128xf32>
    %42 = vector.shape_cast %35 : vector<64x1xi1> to vector<64x1xi1>
    %43 = vector.broadcast %42 : vector<64x1xi1> to vector<64x128xi1>
    %44 = arith.select %43, %41, %33 : vector<64x128xi1>, vector<64x128xf32>
    %45 = math.absf %9 : vector<64x128xf32>
    %cst_14 = arith.constant dense<0xFF800000> : vector<64xf32>
    %46 = vector.multi_reduction <maximumf>, %45, %cst_14 [1] : vector<64x128xf32> to vector<64xf32>
    %47 = vector.shape_cast %46 : vector<64xf32> to vector<64x1xf32>
    %cst_15 = arith.constant 0.000000e+00 : f32
    %48 = vector.broadcast %cst_15 : f32 to vector<64x1xf32>
    %49 = arith.cmpf oeq, %47, %48 : vector<64x1xf32>
    %cst_16 = arith.constant 0.000000e+00 : f32
    %50 = vector.shape_cast %49 : vector<64x1xi1> to vector<64x1xi1>
    %51 = vector.broadcast %50 : vector<64x1xi1> to vector<64x128xi1>
    %52 = vector.broadcast %cst_16 : f32 to vector<64x128xf32>
    %53 = arith.select %51, %52, %44 : vector<64x128xi1>, vector<64x128xf32>
    %54 = vector.extract_strided_slice %8 {offsets = [0, 128], sizes = [64, 128], strides = [1, 1]} : vector<64x256xf32> to vector<64x128xf32>
    %55 = arith.mulf %54, %54 : vector<64x128xf32>
    %cst_17 = arith.constant dense<0.000000e+00> : vector<64xf32>
    %56 = vector.multi_reduction <add>, %55, %cst_17 [1] : vector<64x128xf32> to vector<64xf32>
    %57 = vector.shape_cast %56 : vector<64xf32> to vector<64x1xf32>
    %58 = math.sqrt %57 : vector<64x1xf32>
    %cst_18 = arith.constant 1.000000e-15 : f32
    %59 = vector.broadcast %cst_18 : f32 to vector<64x1xf32>
    %60 = arith.maximumf %58, %59 : vector<64x1xf32>
    %61 = arith.divf %60, %6 : vector<64x1xf32>
    %cst_19 = arith.constant -0.99999988 : f32
    %cst_20 = arith.constant 0.99999988 : f32
    %62 = vector.broadcast %cst_19 : f32 to vector<64x1xf32>
    %63 = arith.maximumf %62, %6 : vector<64x1xf32>
    %64 = vector.broadcast %cst_20 : f32 to vector<64x1xf32>
    %65 = arith.minimumf %64, %63 : vector<64x1xf32>
    %66 = math.log1p %65 : vector<64x1xf32>
    %cst_21 = arith.constant 0.000000e+00 : f32
    %67 = vector.broadcast %cst_21 : f32 to vector<64x1xf32>
    %68 = arith.subf %67, %65 : vector<64x1xf32>
    %69 = math.log1p %68 : vector<64x1xf32>
    %70 = arith.subf %66, %69 : vector<64x1xf32>
    %cst_22 = arith.constant 5.000000e-01 : f32
    %71 = vector.broadcast %cst_22 : f32 to vector<64x1xf32>
    %72 = arith.mulf %71, %70 : vector<64x1xf32>
    %73 = arith.mulf %61, %72 : vector<64x1xf32>
    %74 = math.tanh %73 : vector<64x1xf32>
    %75 = vector.broadcast %60 : vector<64x1xf32> to vector<64x128xf32>
    %76 = arith.divf %54, %75 : vector<64x128xf32>
    %77 = vector.broadcast %74 : vector<64x1xf32> to vector<64x128xf32>
    %78 = arith.mulf %77, %76 : vector<64x128xf32>
    %cst_23 = arith.constant 0.995999991 : f32
    %79 = vector.broadcast %cst_23 : f32 to vector<64x1xf32>
    %80 = arith.cmpf ogt, %74, %79 : vector<64x1xf32>
    %cst_24 = arith.constant 1.000000e-15 : f32
    %81 = vector.broadcast %cst_24 : f32 to vector<64x1xf32>
    %82 = arith.maximumf %74, %81 : vector<64x1xf32>
    %cst_25 = arith.constant 0.995999991 : f32
    %83 = vector.broadcast %cst_25 : f32 to vector<64x1xf32>
    %84 = arith.divf %83, %82 : vector<64x1xf32>
    %85 = vector.broadcast %84 : vector<64x1xf32> to vector<64x128xf32>
    %86 = arith.mulf %78, %85 : vector<64x128xf32>
    %87 = vector.shape_cast %80 : vector<64x1xi1> to vector<64x1xi1>
    %88 = vector.broadcast %87 : vector<64x1xi1> to vector<64x128xi1>
    %89 = arith.select %88, %86, %78 : vector<64x128xi1>, vector<64x128xf32>
    %90 = math.absf %54 : vector<64x128xf32>
    %cst_26 = arith.constant dense<0xFF800000> : vector<64xf32>
    %91 = vector.multi_reduction <maximumf>, %90, %cst_26 [1] : vector<64x128xf32> to vector<64xf32>
    %92 = vector.shape_cast %91 : vector<64xf32> to vector<64x1xf32>
    %cst_27 = arith.constant 0.000000e+00 : f32
    %93 = vector.broadcast %cst_27 : f32 to vector<64x1xf32>
    %94 = arith.cmpf oeq, %92, %93 : vector<64x1xf32>
    %cst_28 = arith.constant 0.000000e+00 : f32
    %95 = vector.shape_cast %94 : vector<64x1xi1> to vector<64x1xi1>
    %96 = vector.broadcast %95 : vector<64x1xi1> to vector<64x128xi1>
    %97 = vector.broadcast %cst_28 : f32 to vector<64x128xf32>
    %98 = arith.select %96, %97, %89 : vector<64x128xi1>, vector<64x128xf32>
    %99 = tpu.concatenate %53, %98 in 1 : vector<64x128xf32>, vector<64x128xf32> -> vector<64x256xf32>
    %c0_29 = arith.constant 0 : index
    %c0_30 = arith.constant 0 : index
    %100 = vector.load %arg3[%c0_29, %c0_30] : memref<64x256xf32, #tpu.memory_space<vmem>>, vector<64x256xf32>
    tpu.vector_store %arg3[%c0_29, %c0_30], %99 {strides = array<i32>} : memref<64x256xf32, #tpu.memory_space<vmem>>, vector<64x256xf32>,
    return
  }
  func.func @transform_0(%arg0: i32) -> (i32, i32) {
    %c0_i32 = arith.constant 0 : i32
    %c0_i32_0 = arith.constant 0 : i32
    return %arg0, %c0_i32 : i32, i32
  }
  func.func @transform_1(%arg0: i32) -> (i32, i32) {
    %c0_i32 = arith.constant 0 : i32
    %c0_i32_0 = arith.constant 0 : i32
    %c0_i32_1 = arith.constant 0 : i32
    return %c0_i32, %c0_i32_0 : i32, i32
  }
  func.func @transform_2(%arg0: i32) -> (i32, i32) {
    %c0_i32 = arith.constant 0 : i32
    %c0_i32_0 = arith.constant 0 : i32
    return %arg0, %c0_i32 : i32, i32
  }
}

</mosaic_0001>

<llo_original>
// kernel: tpu_custom_call.1
$region0: #{tpu_custom_call.1}
  #allocation0 [shape = 'u32[]', space=smem, size = 0x4, offset = 0x4, fixed_abs, tag = 'smem constant byte address 0x4 - core index']
  #allocation1 [shape = 'u32[144,128]{1,0:T(1,128)}', space=vmem, size = 0x12000, scoped, tag = 'internal scratch']
  %s0 = inlined_call_operand.hbm [shape: f32[64,128], index: 0, kind: input, shape index: {}]
  %s1 = inlined_call_operand.hbm [shape: f32[128,256], index: 1, kind: input, shape index: {}]
  %s2 = inlined_call_operand.hbm [shape: f32[64,256], index: 2, kind: output, shape index: {}]
  %s3 = sld [smem:[#allocation0]]
  $region26: #{tpu_custom_call.1} parent=0
    _
  %s5 = ssub.s32 1, %s3
  %s6 = scalar_select 0, %s5, %s3
  $region1: #{tpu_custom_call.1} parent=0
    #allocation2 [shape = 'u8[32768]{0}', space=vmem, size = 0x8000, scoped, tag = 'input window, operand 0, single buffered']
    #allocation3 [shape = 's32[1]{0}', space=sflag, size = 0x4, scoped, tag = 'scoped memory for tpu_custom_call.1']
    #allocation4 [shape = 's32[1]{0}', space=sflag, size = 0x4, scoped, tag = 'scoped memory for tpu_custom_call.1']
    #allocation5 [shape = 'u8[131072]{0}', space=vmem, size = 0x20000, scoped, tag = 'input window, operand 1, single buffered']
    #allocation6 [shape = 's32[1]{0}', space=sflag, size = 0x4, scoped, tag = 'scoped memory for tpu_custom_call.1']
    #allocation7 [shape = 'u8[65536]{0}', space=vmem, size = 0x10000, scoped, tag = 'output window, operand 0, single buffered']
    %7 = vsyncpa [#allocation3], 0
    %8 = vsyncpa [#allocation6], 0
    %9 = vsyncpa [#allocation4], 0
    // Predicated region
    $region2: #{tpu_custom_call.1} parent=1 // pred_check
      _
    $region3: #{tpu_custom_call.1} parent=1 // pred_check_branch
      %11 = sbr.rel (0) target = $region5
    $region4: #{tpu_custom_call.1} parent=1 // pred_region
      %s13 = ssub.s32 1024, 1024
      %14 = vsyncadd [#allocation3], %s13
      %s15 = sshll.u32 [#allocation2], 4
      %s16 = int_to_ptr.vmem [resolvable:$true] %s15
      %21 = dma.hbm_to_vmem [thread:$0]  %s0, 1024, %s16, [#allocation3], 128, 128, 8
    $region5: #{tpu_custom_call.1} parent=1 // pred_fallthru
      _
    // Predicated region
    $region6: #{tpu_custom_call.1} parent=1 // pred_check
      _
    $region7: #{tpu_custom_call.1} parent=1 // pred_check_branch
      %23 = sbr.rel (0) target = $region9
    $region8: #{tpu_custom_call.1} parent=1 // pred_region
      %s25 = ssub.s32 4096, 4096
      %26 = vsyncadd [#allocation6], %s25
      %s27 = sshll.u32 [#allocation5], 4
      %s28 = int_to_ptr.vmem [resolvable:$true] %s27
      %33 = dma.hbm_to_vmem [thread:$0]  %s1, 4096, %s28, [#allocation6], 256, 256, 16
    $region9: #{tpu_custom_call.1} parent=1 // pred_fallthru
      _
    // Predicated region
    $region10: #{tpu_custom_call.1} parent=1 // pred_check
      _
    $region11: #{tpu_custom_call.1} parent=1 // pred_check_branch
      %35 = sbr.rel (0) target = $region13
    $region12: #{tpu_custom_call.1} parent=1 // pred_region
      %36 = dma.done [#allocation3], 1024
    $region13: #{tpu_custom_call.1} parent=1 // pred_fallthru
      _
    // Predicated region
    $region14: #{tpu_custom_call.1} parent=1 // pred_check
      _
    $region15: #{tpu_custom_call.1} parent=1 // pred_check_branch
      %38 = sbr.rel (0) target = $region17
    $region16: #{tpu_custom_call.1} parent=1 // pred_region
      %39 = dma.done [#allocation6], 4096
    $region17: #{tpu_custom_call.1} parent=1 // pred_fallthru
      _
    %v40 = vld [vmem:[#allocation2] sm:$0xff]
    %v41 = vld [vmem:[#allocation2 + $0x8] sm:$0xff]
    %v42 = vld [vmem:[#allocation2 + $0x10] sm:$0xff]
    %v43 = vld [vmem:[#allocation2 + $0x18] sm:$0xff]
    %v44 = vld [vmem:[#allocation2 + $0x20] sm:$0xff]
    %v45 = vld [vmem:[#allocation2 + $0x28] sm:$0xff]
    %v46 = vld [vmem:[#allocation2 + $0x30] sm:$0xff]
    %v47 = vld [vmem:[#allocation2 + $0x38] sm:$0xff]
    %v48 = vmul.f32 %v40, %v40
    %v49 = vmul.f32 %v41, %v41
    %v50 = vmul.f32 %v42, %v42
    %v51 = vmul.f32 %v43, %v43
    %v52 = vmul.f32 %v44, %v44
    %v53 = vmul.f32 %v45, %v45
    %v54 = vmul.f32 %v46, %v46
    %v55 = vmul.f32 %v47, %v47
    %56 = vadd.xlane.f32.xlu0 %v48
    %v57 = vpop.xlane.xlu0 %56
    %58 = vadd.xlane.f32.xlu0 %v49
    %v59 = vpop.xlane.xlu0 %58
    %60 = vadd.xlane.f32.xlu0 %v50
    %v61 = vpop.xlane.xlu0 %60
    %62 = vadd.xlane.f32.xlu0 %v51
    %v63 = vpop.xlane.xlu0 %62
    %64 = vadd.xlane.f32.xlu0 %v52
    %v65 = vpop.xlane.xlu0 %64
    %66 = vadd.xlane.f32.xlu0 %v53
    %v67 = vpop.xlane.xlu0 %66
    %68 = vadd.xlane.f32.xlu0 %v54
    %v69 = vpop.xlane.xlu0 %68
    %70 = vadd.xlane.f32.xlu0 %v55
    %v71 = vpop.xlane.xlu0 %70
    %v72 = vrsqrt.pop %v57
    %v73 = vmul.f32 %v57, %v72
    %vm74 = vcmp.eq.f32.partialorder %v57, inf
    %v75 = vsel %vm74, %v57, %v73
    %vm76 = vcmp.eq.f32.partialorder %v57, 0.0
    %v77 = vand.u32 %v57, 2147483648
    %v78 = vsel %vm76, %v77, %v75
    %v79 = vrsqrt.pop %v59
    %v80 = vmul.f32 %v59, %v79
    %vm81 = vcmp.eq.f32.partialorder %v59, inf
    %v82 = vsel %vm81, %v59, %v80
    %vm83 = vcmp.eq.f32.partialorder %v59, 0.0
    %v84 = vand.u32 %v59, 2147483648
    %v85 = vsel %vm83, %v84, %v82
    %v86 = vrsqrt.pop %v61
    %v87 = vmul.f32 %v61, %v86
    %vm88 = vcmp.eq.f32.partialorder %v61, inf
    %v89 = vsel %vm88, %v61, %v87
    %vm90 = vcmp.eq.f32.partialorder %v61, 0.0
    %v91 = vand.u32 %v61, 2147483648
    %v92 = vsel %vm90, %v91, %v89
    %v93 = vrsqrt.pop %v63
    %v94 = vmul.f32 %v63, %v93
    %vm95 = vcmp.eq.f32.partialorder %v63, inf
    %v96 = vsel %vm95, %v63, %v94
    %vm97 = vcmp.eq.f32.partialorder %v63, 0.0
    %v98 = vand.u32 %v63, 2147483648
    %v99 = vsel %vm97, %v98, %v96
    %v100 = vrsqrt.pop %v65
    %v101 = vmul.f32 %v65, %v100
    %vm102 = vcmp.eq.f32.partialorder %v65, inf
    %v103 = vsel %vm102, %v65, %v101
    %vm104 = vcmp.eq.f32.partialorder %v65, 0.0
    %v105 = vand.u32 %v65, 2147483648
    %v106 = vsel %vm104, %v105, %v103
    %v107 = vrsqrt.pop %v67
    %v108 = vmul.f32 %v67, %v107
    %vm109 = vcmp.eq.f32.partialorder %v67, inf
    %v110 = vsel %vm109, %v67, %v108
    %vm111 = vcmp.eq.f32.partialorder %v67, 0.0
    %v112 = vand.u32 %v67, 2147483648
    %v113 = vsel %vm111, %v112, %v110
    %v114 = vrsqrt.pop %v69
    %v115 = vmul.f32 %v69, %v114
    %vm116 = vcmp.eq.f32.partialorder %v69, inf
    %v117 = vsel %vm116, %v69, %v115
    %vm118 = vcmp.eq.f32.partialorder %v69, 0.0
    %v119 = vand.u32 %v69, 2147483648
    %v120 = vsel %vm118, %v119, %v117
    %v121 = vrsqrt.pop %v71
    %v122 = vmul.f32 %v71, %v121
    %vm123 = vcmp.eq.f32.partialorder %v71, inf
    %v124 = vsel %vm123, %v71, %v122
    %vm125 = vcmp.eq.f32.partialorder %v71, 0.0
    %v126 = vand.u32 %v71, 2147483648
    %v127 = vsel %vm125, %v126, %v124
    %v128 = vmax.f32 %v78, 1e-15
    %v129 = vmax.f32 %v85, 1e-15
    %v130 = vmax.f32 %v92, 1e-15
    %v131 = vmax.f32 %v99, 1e-15
    %v132 = vmax.f32 %v106, 1e-15
    %v133 = vmax.f32 %v113, 1e-15
    %v134 = vmax.f32 %v120, 1e-15
    %v135 = vmax.f32 %v127, 1e-15
    %v136 = vld [vmem:[#allocation5] sm:$0xff]
    %v137 = vld [vmem:[#allocation5 + $0x8] sm:$0xff]
    %v138 = vld [vmem:[#allocation5 + $0x10] sm:$0xff]
    %v139 = vld [vmem:[#allocation5 + $0x18] sm:$0xff]
    %v140 = vld [vmem:[#allocation5 + $0x20] sm:$0xff]
    %v141 = vld [vmem:[#allocation5 + $0x28] sm:$0xff]
    %v142 = vld [vmem:[#allocation5 + $0x30] sm:$0xff]
    %v143 = vld [vmem:[#allocation5 + $0x38] sm:$0xff]
    %v144 = vld [vmem:[#allocation5 + $0x40] sm:$0xff]
    %v145 = vld [vmem:[#allocation5 + $0x48] sm:$0xff]
    %v146 = vld [vmem:[#allocation5 + $0x50] sm:$0xff]
    %v147 = vld [vmem:[#allocation5 + $0x58] sm:$0xff]
    %v148 = vld [vmem:[#allocation5 + $0x60] sm:$0xff]
    %v149 = vld [vmem:[#allocation5 + $0x68] sm:$0xff]
    %v150 = vld [vmem:[#allocation5 + $0x70] sm:$0xff]
    %v151 = vld [vmem:[#allocation5 + $0x78] sm:$0xff]
    %v152 = vld [vmem:[#allocation5 + $0x80] sm:$0xff]
    %v153 = vld [vmem:[#allocation5 + $0x88] sm:$0xff]
    %v154 = vld [vmem:[#allocation5 + $0x90] sm:$0xff]
    %v155 = vld [vmem:[#allocation5 + $0x98] sm:$0xff]
    %v156 = vld [vmem:[#allocation5 + $0xa0] sm:$0xff]
    %v157 = vld [vmem:[#allocation5 + $0xa8] sm:$0xff]
    %v158 = vld [vmem:[#allocation5 + $0xb0] sm:$0xff]
    %v159 = vld [vmem:[#allocation5 + $0xb8] sm:$0xff]
    %v160 = vld [vmem:[#allocation5 + $0xc0] sm:$0xff]
    %v161 = vld [vmem:[#allocation5 + $0xc8] sm:$0xff]
    %v162 = vld [vmem:[#allocation5 + $0xd0] sm:$0xff]
    %v163 = vld [vmem:[#allocation5 + $0xd8] sm:$0xff]
    %v164 = vld [vmem:[#allocation5 + $0xe0] sm:$0xff]
    %v165 = vld [vmem:[#allocation5 + $0xe8] sm:$0xff]
    %v166 = vld [vmem:[#allocation5 + $0xf0] sm:$0xff]
    %v167 = vld [vmem:[#allocation5 + $0xf8] sm:$0xff]
    %168 = vmatprep.subr.mxu0 %v167
    %169 = vmatpush1.msra.mxu0 %v166
    %170 = vmatprep.subr.mxu0 %v165
    %171 = vmatpush1.msra.mxu0 %v164
    %172 = vmatprep.subr.mxu0 %v163
    %173 = vmatpush1.msra.mxu0 %v162
    %174 = vmatprep.subr.mxu0 %v161
    %175 = vmatpush1.msra.mxu0 %v160
    %176 = vmatprep.subr.mxu0 %v159
    %177 = vmatpush1.msra.mxu0 %v158
    %178 = vmatprep.subr.mxu0 %v157
    %179 = vmatpush1.msra.mxu0 %v156
    %180 = vmatprep.subr.mxu0 %v155
    %181 = vmatpush1.msra.mxu0 %v154
    %182 = vmatprep.subr.mxu0 %v153
    %183 = vmatpush1.msra.mxu0 %v152
    %184 = vmatprep.subr.mxu0 %v151
    %185 = vmatpush1.msra.mxu0 %v150
    %186 = vmatprep.subr.mxu0 %v149
    %187 = vmatpush1.msra.mxu0 %v148
    %188 = vmatprep.subr.mxu0 %v147
    %189 = vmatpush1.msra.mxu0 %v146
    %190 = vmatprep.subr.mxu0 %v145
    %191 = vmatpush1.msra.mxu0 %v144
    %192 = vmatprep.subr.mxu0 %v143
    %193 = vmatpush1.msra.mxu0 %v142
    %194 = vmatprep.subr.mxu0 %v141
    %195 = vmatpush1.msra.mxu0 %v140
    %196 = vmatprep.subr.mxu0 %v139
    %197 = vmatpush1.msra.mxu0 %v138
    %198 = vmatprep.subr.mxu0 %v137
    %199 = vmatpush1.msra.mxu0 %v136
    %200 = vmatprep.subr.mxu0 0.0
    %201 = vmatpush2.msra.mxu0 0.0
    %202 = vmatprep.subr.mxu0 0.0
    %203 = vmatpush2.msra.mxu0 0.0
    %204 = vmatprep.subr.mxu0 0.0
    %205 = vmatpush2.msra.mxu0 0.0
    %206 = vmatprep.subr.mxu0 0.0
    %207 = vmatpush2.msra.mxu0 0.0
    %208 = vmatprep.subr.mxu0 0.0
    %209 = vmatpush2.msra.mxu0 0.0
    %210 = vmatprep.subr.mxu0 0.0
    %211 = vmatpush2.msra.mxu0 0.0
    %212 = vmatprep.subr.mxu0 0.0
    %213 = vmatpush2.msra.mxu0 0.0
    %214 = vmatprep.subr.mxu0 0.0
    %215 = vmatpush2.msra.mxu0 0.0
    %216 = vmatprep.subr.mxu0 0.0
    %217 = vmatpush2.msra.mxu0 0.0
    %218 = vmatprep.subr.mxu0 0.0
    %219 = vmatpush2.msra.mxu0 0.0
    %220 = vmatprep.subr.mxu0 0.0
    %221 = vmatpush2.msra.mxu0 0.0
    %222 = vmatprep.subr.mxu0 0.0
    %223 = vmatpush2.msra.mxu0 0.0
    %224 = vmatprep.subr.mxu0 0.0
    %225 = vmatpush2.msra.mxu0 0.0
    %226 = vmatprep.subr.mxu0 0.0
    %227 = vmatpush2.msra.mxu0 0.0
    %228 = vmatprep.subr.mxu0 0.0
    %229 = vmatpush2.msra.mxu0 0.0
    %230 = vmatprep.subr.mxu0 0.0
    %231 = vmatpush2.msra.mxu0 0.0
    %232 = vmatprep.mubr.f32.mxu0 0.0
    %233 = vmatmul.mubr.f32.gmra.mxu0 %v40
    %v234 = vpop.f32.mrf.mxu0
    %v235 = vadd.f32 0.0, %v234
    %v236 = vpop.f32.mrf.mxu0
    %v237 = vadd.f32 0.0, %v236
    %238 = vmatprep.mubr.f32.mxu0 0.0
    %239 = vmatmul.mubr.f32.gmra.mxu0 %v41
    %v240 = vpop.f32.mrf.mxu0
    %v241 = vadd.f32 0.0, %v240
    %v242 = vpop.f32.mrf.mxu0
    %v243 = vadd.f32 0.0, %v242
    %244 = vmatprep.mubr.f32.mxu0 0.0
    %245 = vmatmul.mubr.f32.gmra.mxu0 %v42
    %v246 = vpop.f32.mrf.mxu0
    %v247 = vadd.f32 0.0, %v246
    %v248 = vpop.f32.mrf.mxu0
    %v249 = vadd.f32 0.0, %v248
    %250 = vmatprep.mubr.f32.mxu0 0.0
    %251 = vmatmul.mubr.f32.gmra.mxu0 %v43
    %v252 = vpop.f32.mrf.mxu0
    %v253 = vadd.f32 0.0, %v252
    %v254 = vpop.f32.mrf.mxu0
    %v255 = vadd.f32 0.0, %v254
    %256 = vmatprep.mubr.f32.mxu0 0.0
    %257 = vmatmul.mubr.f32.gmra.mxu0 %v44
    %v258 = vpop.f32.mrf.mxu0
    %v259 = vadd.f32 0.0, %v258
    %v260 = vpop.f32.mrf.mxu0
    %v261 = vadd.f32 0.0, %v260
    %262 = vmatprep.mubr.f32.mxu0 0.0
    %263 = vmatmul.mubr.f32.gmra.mxu0 %v45
    %v264 = vpop.f32.mrf.mxu0
    %v265 = vadd.f32 0.0, %v264
    %v266 = vpop.f32.mrf.mxu0
    %v267 = vadd.f32 0.0, %v266
    %268 = vmatprep.mubr.f32.mxu0 0.0
    %269 = vmatmul.mubr.f32.gmra.mxu0 %v46
    %v270 = vpop.f32.mrf.mxu0
    %v271 = vadd.f32 0.0, %v270
    %v272 = vpop.f32.mrf.mxu0
    %v273 = vadd.f32 0.0, %v272
    %274 = vmatprep.mubr.f32.mxu0 0.0
    %275 = vmatmul.mubr.f32.gmra.mxu0 %v47
    %v276 = vpop.f32.mrf.mxu0
    %v277 = vadd.f32 0.0, %v276
    %v278 = vpop.f32.mrf.mxu0
    %v279 = vadd.f32 0.0, %v278
    %280 = vdwg.mxu0
    %v281 = vmul.f32 %v235, %v235
    %v282 = vmul.f32 %v241, %v241
    %v283 = vmul.f32 %v247, %v247
    %v284 = vmul.f32 %v253, %v253
    %v285 = vmul.f32 %v259, %v259
    %v286 = vmul.f32 %v265, %v265
    %v287 = vmul.f32 %v271, %v271
    %v288 = vmul.f32 %v277, %v277
    %289 = vadd.xlane.f32.xlu0 %v281
    %v290 = vpop.xlane.xlu0 %289
    %291 = vadd.xlane.f32.xlu0 %v282
    %v292 = vpop.xlane.xlu0 %291
    %293 = vadd.xlane.f32.xlu0 %v283
    %v294 = vpop.xlane.xlu0 %293
    %295 = vadd.xlane.f32.xlu0 %v284
    %v296 = vpop.xlane.xlu0 %295
    %297 = vadd.xlane.f32.xlu0 %v285
    %v298 = vpop.xlane.xlu0 %297
    %299 = vadd.xlane.f32.xlu0 %v286
    %v300 = vpop.xlane.xlu0 %299
    %301 = vadd.xlane.f32.xlu0 %v287
    %v302 = vpop.xlane.xlu0 %301
    %303 = vadd.xlane.f32.xlu0 %v288
    %v304 = vpop.xlane.xlu0 %303
    %v305 = vrsqrt.pop %v290
    %v306 = vmul.f32 %v290, %v305
    %vm307 = vcmp.eq.f32.partialorder %v290, inf
    %v308 = vsel %vm307, %v290, %v306
    %vm309 = vcmp.eq.f32.partialorder %v290, 0.0
    %v310 = vand.u32 %v290, 2147483648
    %v311 = vsel %vm309, %v310, %v308
    %v312 = vrsqrt.pop %v292
    %v313 = vmul.f32 %v292, %v312
    %vm314 = vcmp.eq.f32.partialorder %v292, inf
    %v315 = vsel %vm314, %v292, %v313
    %vm316 = vcmp.eq.f32.partialorder %v292, 0.0
    %v317 = vand.u32 %v292, 2147483648
    %v318 = vsel %vm316, %v317, %v315
    %v319 = vrsqrt.pop %v294
    %v320 = vmul.f32 %v294, %v319
    %vm321 = vcmp.eq.f32.partialorder %v294, inf
    %v322 = vsel %vm321, %v294, %v320
    %vm323 = vcmp.eq.f32.partialorder %v294, 0.0
    %v324 = vand.u32 %v294, 2147483648
    %v325 = vsel %vm323, %v324, %v322
    %v326 = vrsqrt.pop %v296
    %v327 = vmul.f32 %v296, %v326
    %vm328 = vcmp.eq.f32.partialorder %v296, inf
    %v329 = vsel %vm328, %v296, %v327
    %vm330 = vcmp.eq.f32.partialorder %v296, 0.0
    %v331 = vand.u32 %v296, 2147483648
    %v332 = vsel %vm330, %v331, %v329
    %v333 = vrsqrt.pop %v298
    %v334 = vmul.f32 %v298, %v333
    %vm335 = vcmp.eq.f32.partialorder %v298, inf
    %v336 = vsel %vm335, %v298, %v334
    %vm337 = vcmp.eq.f32.partialorder %v298, 0.0
    %v338 = vand.u32 %v298, 2147483648
    %v339 = vsel %vm337, %v338, %v336
    %v340 = vrsqrt.pop %v300
    %v341 = vmul.f32 %v300, %v340
    %vm342 = vcmp.eq.f32.partialorder %v300, inf
    %v343 = vsel %vm342, %v300, %v341
    %vm344 = vcmp.eq.f32.partialorder %v300, 0.0
    %v345 = vand.u32 %v300, 2147483648
    %v346 = vsel %vm344, %v345, %v343
    %v347 = vrsqrt.pop %v302
    %v348 = vmul.f32 %v302, %v347
    %vm349 = vcmp.eq.f32.partialorder %v302, inf
    %v350 = vsel %vm349, %v302, %v348
    %vm351 = vcmp.eq.f32.partialorder %v302, 0.0
    %v352 = vand.u32 %v302, 2147483648
    %v353 = vsel %vm351, %v352, %v350
    %v354 = vrsqrt.pop %v304
    %v355 = vmul.f32 %v304, %v354
    %vm356 = vcmp.eq.f32.partialorder %v304, inf
    %v357 = vsel %vm356, %v304, %v355
    %vm358 = vcmp.eq.f32.partialorder %v304, 0.0
    %v359 = vand.u32 %v304, 2147483648
    %v360 = vsel %vm358, %v359, %v357
    %v361 = vmax.f32 %v311, 1e-15
    %v362 = vmax.f32 %v318, 1e-15
    %v363 = vmax.f32 %v325, 1e-15
    %v364 = vmax.f32 %v332, 1e-15
    %v365 = vmax.f32 %v339, 1e-15
    %v366 = vmax.f32 %v346, 1e-15
    %v367 = vmax.f32 %v353, 1e-15
    %v368 = vmax.f32 %v360, 1e-15
    %v369 = vrcp.pop %v128
    %v370 = vmul.f32 %v361, %v369
    %v371 = vrcp.pop %v129
    %v372 = vmul.f32 %v362, %v371
    %v373 = vrcp.pop %v130
    %v374 = vmul.f32 %v363, %v373
    %v375 = vrcp.pop %v131
    %v376 = vmul.f32 %v364, %v375
    %v377 = vrcp.pop %v132
    %v378 = vmul.f32 %v365, %v377
    %v379 = vrcp.pop %v133
    %v380 = vmul.f32 %v366, %v379
    %v381 = vrcp.pop %v134
    %v382 = vmul.f32 %v367, %v381
    %v383 = vrcp.pop %v135
    %v384 = vmul.f32 %v368, %v383
    %v385 = vmax.f32 %v128, -0.9999999
    %v386 = vmax.f32 %v129, -0.9999999
    %v387 = vmax.f32 %v130, -0.9999999
    %v388 = vmax.f32 %v131, -0.9999999
    %v389 = vmax.f32 %v132, -0.9999999
    %v390 = vmax.f32 %v133, -0.9999999
    %v391 = vmax.f32 %v134, -0.9999999
    %v392 = vmax.f32 %v135, -0.9999999
    %v393 = vmin.f32 %v385, 0.9999999
    %v394 = vmin.f32 %v386, 0.9999999
    %v395 = vmin.f32 %v387, 0.9999999
    %v396 = vmin.f32 %v388, 0.9999999
    %v397 = vmin.f32 %v389, 0.9999999
    %v398 = vmin.f32 %v390, 0.9999999
    %v399 = vmin.f32 %v391, 0.9999999
    %v400 = vmin.f32 %v392, 0.9999999
    %v401 = vadd.f32 %v393, 1.0
    %v402 = vlog2.pop %v401
    %v403 = vmul.f32 %v402, 0.6931472
    %v404 = vmul.f32 -0.5, %v393
    %v405 = vadd.f32 %v404, 1.0
    %v406 = vmul.f32 %v405, %v393
    %v407 = vand.u32 2147483647, %v393
    %vm408 = vcmp.lt.f32.partialorder %v407, 0.0004427343
    %v409 = vsel %vm408, %v406, %v403
    %v410 = vadd.f32 %v394, 1.0
    %v411 = vlog2.pop %v410
    %v412 = vmul.f32 %v411, 0.6931472
    %v413 = vmul.f32 -0.5, %v394
    %v414 = vadd.f32 %v413, 1.0
    %v415 = vmul.f32 %v414, %v394
    %v416 = vand.u32 2147483647, %v394
    %vm417 = vcmp.lt.f32.partialorder %v416, 0.0004427343
    %v418 = vsel %vm417, %v415, %v412
    %v419 = vadd.f32 %v395, 1.0
    %v420 = vlog2.pop %v419
    %v421 = vmul.f32 %v420, 0.6931472
    %v422 = vmul.f32 -0.5, %v395
    %v423 = vadd.f32 %v422, 1.0
    %v424 = vmul.f32 %v423, %v395
    %v425 = vand.u32 2147483647, %v395
    %vm426 = vcmp.lt.f32.partialorder %v425, 0.0004427343
    %v427 = vsel %vm426, %v424, %v421
    %v428 = vadd.f32 %v396, 1.0
    %v429 = vlog2.pop %v428
    %v430 = vmul.f32 %v429, 0.6931472
    %v431 = vmul.f32 -0.5, %v396
    %v432 = vadd.f32 %v431, 1.0
    %v433 = vmul.f32 %v432, %v396
    %v434 = vand.u32 2147483647, %v396
    %vm435 = vcmp.lt.f32.partialorder %v434, 0.0004427343
    %v436 = vsel %vm435, %v433, %v430
    %v437 = vadd.f32 %v397, 1.0
    %v438 = vlog2.pop %v437
    %v439 = vmul.f32 %v438, 0.6931472
    %v440 = vmul.f32 -0.5, %v397
    %v441 = vadd.f32 %v440, 1.0
    %v442 = vmul.f32 %v441, %v397
    %v443 = vand.u32 2147483647, %v397
    %vm444 = vcmp.lt.f32.partialorder %v443, 0.0004427343
    %v445 = vsel %vm444, %v442, %v439
    %v446 = vadd.f32 %v398, 1.0
    %v447 = vlog2.pop %v446
    %v448 = vmul.f32 %v447, 0.6931472
    %v449 = vmul.f32 -0.5, %v398
    %v450 = vadd.f32 %v449, 1.0
    %v451 = vmul.f32 %v450, %v398
    %v452 = vand.u32 2147483647, %v398
    %vm453 = vcmp.lt.f32.partialorder %v452, 0.0004427343
    %v454 = vsel %vm453, %v451, %v448
    %v455 = vadd.f32 %v399, 1.0
    %v456 = vlog2.pop %v455
    %v457 = vmul.f32 %v456, 0.6931472
    %v458 = vmul.f32 -0.5, %v399
    %v459 = vadd.f32 %v458, 1.0
    %v460 = vmul.f32 %v459, %v399
    %v461 = vand.u32 2147483647, %v399
    %vm462 = vcmp.lt.f32.partialorder %v461, 0.0004427343
    %v463 = vsel %vm462, %v460, %v457
    %v464 = vadd.f32 %v400, 1.0
    %v465 = vlog2.pop %v464
    %v466 = vmul.f32 %v465, 0.6931472
    %v467 = vmul.f32 -0.5, %v400
    %v468 = vadd.f32 %v467, 1.0
    %v469 = vmul.f32 %v468, %v400
    %v470 = vand.u32 2147483647, %v400
    %vm471 = vcmp.lt.f32.partialorder %v470, 0.0004427343
    %v472 = vsel %vm471, %v469, %v466
    %v473 = vsub.f32 0.0, %v393
    %v474 = vsub.f32 0.0, %v394
    %v475 = vsub.f32 0.0, %v395
    %v476 = vsub.f32 0.0, %v396
    %v477 = vsub.f32 0.0, %v397
    %v478 = vsub.f32 0.0, %v398
    %v479 = vsub.f32 0.0, %v399
    %v480 = vsub.f32 0.0, %v400
    %v481 = vadd.f32 %v473, 1.0
    %v482 = vlog2.pop %v481
    %v483 = vmul.f32 %v482, 0.6931472
    %v484 = vmul.f32 -0.5, %v473
    %v485 = vadd.f32 %v484, 1.0
    %v486 = vmul.f32 %v485, %v473
    %v487 = vand.u32 2147483647, %v473
    %vm488 = vcmp.lt.f32.partialorder %v487, 0.0004427343
    %v489 = vsel %vm488, %v486, %v483
    %v490 = vadd.f32 %v474, 1.0
    %v491 = vlog2.pop %v490
    %v492 = vmul.f32 %v491, 0.6931472
    %v493 = vmul.f32 -0.5, %v474
    %v494 = vadd.f32 %v493, 1.0
    %v495 = vmul.f32 %v494, %v474
    %v496 = vand.u32 2147483647, %v474
    %vm497 = vcmp.lt.f32.partialorder %v496, 0.0004427343
    %v498 = vsel %vm497, %v495, %v492
    %v499 = vadd.f32 %v475, 1.0
    %v500 = vlog2.pop %v499
    %v501 = vmul.f32 %v500, 0.6931472
    %v502 = vmul.f32 -0.5, %v475
    %v503 = vadd.f32 %v502, 1.0
    %v504 = vmul.f32 %v503, %v475
    %v505 = vand.u32 2147483647, %v475
    %vm506 = vcmp.lt.f32.partialorder %v505, 0.0004427343
    %v507 = vsel %vm506, %v504, %v501
    %v508 = vadd.f32 %v476, 1.0
    %v509 = vlog2.pop %v508
    %v510 = vmul.f32 %v509, 0.6931472
    %v511 = vmul.f32 -0.5, %v476
    %v512 = vadd.f32 %v511, 1.0
    %v513 = vmul.f32 %v512, %v476
    %v514 = vand.u32 2147483647, %v476
    %vm515 = vcmp.lt.f32.partialorder %v514, 0.0004427343
    %v516 = vsel %vm515, %v513, %v510
    %v517 = vadd.f32 %v477, 1.0
    %v518 = vlog2.pop %v517
    %v519 = vmul.f32 %v518, 0.6931472
    %v520 = vmul.f32 -0.5, %v477
    %v521 = vadd.f32 %v520, 1.0
    %v522 = vmul.f32 %v521, %v477
    %v523 = vand.u32 2147483647, %v477
    %vm524 = vcmp.lt.f32.partialorder %v523, 0.0004427343
    %v525 = vsel %vm524, %v522, %v519
    %v526 = vadd.f32 %v478, 1.0
    %v527 = vlog2.pop %v526
    %v528 = vmul.f32 %v527, 0.6931472
    %v529 = vmul.f32 -0.5, %v478
    %v530 = vadd.f32 %v529, 1.0
    %v531 = vmul.f32 %v530, %v478
    %v532 = vand.u32 2147483647, %v478
    %vm533 = vcmp.lt.f32.partialorder %v532, 0.0004427343
    %v534 = vsel %vm533, %v531, %v528
    %v535 = vadd.f32 %v479, 1.0
    %v536 = vlog2.pop %v535
    %v537 = vmul.f32 %v536, 0.6931472
    %v538 = vmul.f32 -0.5, %v479
    %v539 = vadd.f32 %v538, 1.0
    %v540 = vmul.f32 %v539, %v479
    %v541 = vand.u32 2147483647, %v479
    %vm542 = vcmp.lt.f32.partialorder %v541, 0.0004427343
    %v543 = vsel %vm542, %v540, %v537
    %v544 = vadd.f32 %v480, 1.0
    %v545 = vlog2.pop %v544
    %v546 = vmul.f32 %v545, 0.6931472
    %v547 = vmul.f32 -0.5, %v480
    %v548 = vadd.f32 %v547, 1.0
    %v549 = vmul.f32 %v548, %v480
    %v550 = vand.u32 2147483647, %v480
    %vm551 = vcmp.lt.f32.partialorder %v550, 0.0004427343
    %v552 = vsel %vm551, %v549, %v546
    %v553 = vsub.f32 %v409, %v489
    %v554 = vsub.f32 %v418, %v498
    %v555 = vsub.f32 %v427, %v507
    %v556 = vsub.f32 %v436, %v516
    %v557 = vsub.f32 %v445, %v525
    %v558 = vsub.f32 %v454, %v534
    %v559 = vsub.f32 %v463, %v543
    %v560 = vsub.f32 %v472, %v552
    %v561 = vmul.f32 %v553, 0.5
    %v562 = vmul.f32 %v554, 0.5
    %v563 = vmul.f32 %v555, 0.5
    %v564 = vmul.f32 %v556, 0.5
    %v565 = vmul.f32 %v557, 0.5
    %v566 = vmul.f32 %v558, 0.5
    %v567 = vmul.f32 %v559, 0.5
    %v568 = vmul.f32 %v560, 0.5
    %v569 = vmul.f32 %v370, %v561
    %v570 = vmul.f32 %v372, %v562
    %v571 = vmul.f32 %v374, %v563
    %v572 = vmul.f32 %v376, %v564
    %v573 = vmul.f32 %v378, %v565
    %v574 = vmul.f32 %v380, %v566
    %v575 = vmul.f32 %v382, %v567
    %v576 = vmul.f32 %v384, %v568
    %v577 = vtanh.pop %v569
    %v578 = vtanh.pop %v570
    %v579 = vtanh.pop %v571
    %v580 = vtanh.pop %v572
    %v581 = vtanh.pop %v573
    %v582 = vtanh.pop %v574
    %v583 = vtanh.pop %v575
    %v584 = vtanh.pop %v576
    %v585 = vrcp.pop %v361
    %v586 = vmul.f32 %v235, %v585
    %v587 = vrcp.pop %v362
    %v588 = vmul.f32 %v241, %v587
    %v589 = vrcp.pop %v363
    %v590 = vmul.f32 %v247, %v589
    %v591 = vrcp.pop %v364
    %v592 = vmul.f32 %v253, %v591
    %v593 = vrcp.pop %v365
    %v594 = vmul.f32 %v259, %v593
    %v595 = vrcp.pop %v366
    %v596 = vmul.f32 %v265, %v595
    %v597 = vrcp.pop %v367
    %v598 = vmul.f32 %v271, %v597
    %v599 = vrcp.pop %v368
    %v600 = vmul.f32 %v277, %v599
    %v601 = vmul.f32 %v577, %v586
    %v602 = vmul.f32 %v578, %v588
    %v603 = vmul.f32 %v579, %v590
    %v604 = vmul.f32 %v580, %v592
    %v605 = vmul.f32 %v581, %v594
    %v606 = vmul.f32 %v582, %v596
    %v607 = vmul.f32 %v583, %v598
    %v608 = vmul.f32 %v584, %v600
    %vm609 = vcmp.gt.f32.partialorder %v577, 0.996
    %vm610 = vcmp.gt.f32.partialorder %v578, 0.996
    %vm611 = vcmp.gt.f32.partialorder %v579, 0.996
    %vm612 = vcmp.gt.f32.partialorder %v580, 0.996
    %vm613 = vcmp.gt.f32.partialorder %v581, 0.996
    %vm614 = vcmp.gt.f32.partialorder %v582, 0.996
    %vm615 = vcmp.gt.f32.partialorder %v583, 0.996
    %vm616 = vcmp.gt.f32.partialorder %v584, 0.996
    %v617 = vmax.f32 %v577, 1e-15
    %v618 = vmax.f32 %v578, 1e-15
    %v619 = vmax.f32 %v579, 1e-15
    %v620 = vmax.f32 %v580, 1e-15
    %v621 = vmax.f32 %v581, 1e-15
    %v622 = vmax.f32 %v582, 1e-15
    %v623 = vmax.f32 %v583, 1e-15
    %v624 = vmax.f32 %v584, 1e-15
    %v625 = vrcp.pop %v617
    %v626 = vmul.f32 0.996, %v625
    %v627 = vrcp.pop %v618
    %v628 = vmul.f32 0.996, %v627
    %v629 = vrcp.pop %v619
    %v630 = vmul.f32 0.996, %v629
    %v631 = vrcp.pop %v620
    %v632 = vmul.f32 0.996, %v631
    %v633 = vrcp.pop %v621
    %v634 = vmul.f32 0.996, %v633
    %v635 = vrcp.pop %v622
    %v636 = vmul.f32 0.996, %v635
    %v637 = vrcp.pop %v623
    %v638 = vmul.f32 0.996, %v637
    %v639 = vrcp.pop %v624
    %v640 = vmul.f32 0.996, %v639
    %v641 = vmul.f32 %v601, %v626
    %v642 = vmul.f32 %v602, %v628
    %v643 = vmul.f32 %v603, %v630
    %v644 = vmul.f32 %v604, %v632
    %v645 = vmul.f32 %v605, %v634
    %v646 = vmul.f32 %v606, %v636
    %v647 = vmul.f32 %v607, %v638
    %v648 = vmul.f32 %v608, %v640
    %v649 = vsel %vm609, 1, 0
    %v650 = vsel %vm610, 1, 0
    %v651 = vsel %vm611, 1, 0
    %v652 = vsel %vm612, 1, 0
    %v653 = vsel %vm613, 1, 0
    %v654 = vsel %vm614, 1, 0
    %v655 = vsel %vm615, 1, 0
    %v656 = vsel %vm616, 1, 0
    %vm657 = vcmp.eq.s32.totalorder %v649, 1
    %vm658 = vcmp.eq.s32.totalorder %v650, 1
    %vm659 = vcmp.eq.s32.totalorder %v651, 1
    %vm660 = vcmp.eq.s32.totalorder %v652, 1
    %vm661 = vcmp.eq.s32.totalorder %v653, 1
    %vm662 = vcmp.eq.s32.totalorder %v654, 1
    %vm663 = vcmp.eq.s32.totalorder %v655, 1
    %vm664 = vcmp.eq.s32.totalorder %v656, 1
    %v665 = vsel %vm657, %v641, %v601
    %v666 = vsel %vm658, %v642, %v602
    %v667 = vsel %vm659, %v643, %v603
    %v668 = vsel %vm660, %v644, %v604
    %v669 = vsel %vm661, %v645, %v605
    %v670 = vsel %vm662, %v646, %v606
    %v671 = vsel %vm663, %v647, %v607
    %v672 = vsel %vm664, %v648, %v608
    %v673 = vand.u32 2147483647, %v235
    %v674 = vand.u32 2147483647, %v241
    %v675 = vand.u32 2147483647, %v247
    %v676 = vand.u32 2147483647, %v253
    %v677 = vand.u32 2147483647, %v259
    %v678 = vand.u32 2147483647, %v265
    %v679 = vand.u32 2147483647, %v271
    %v680 = vand.u32 2147483647, %v277
    %681 = vmax.xlane.f32.xlu0 %v673
    %v682 = vpop.xlane.xlu0 %681
    %683 = vmax.xlane.f32.xlu0 %v674
    %v684 = vpop.xlane.xlu0 %683
    %685 = vmax.xlane.f32.xlu0 %v675
    %v686 = vpop.xlane.xlu0 %685
    %687 = vmax.xlane.f32.xlu0 %v676
    %v688 = vpop.xlane.xlu0 %687
    %689 = vmax.xlane.f32.xlu0 %v677
    %v690 = vpop.xlane.xlu0 %689
    %691 = vmax.xlane.f32.xlu0 %v678
    %v692 = vpop.xlane.xlu0 %691
    %693 = vmax.xlane.f32.xlu0 %v679
    %v694 = vpop.xlane.xlu0 %693
    %695 = vmax.xlane.f32.xlu0 %v680
    %v696 = vpop.xlane.xlu0 %695
    %vm697 = vcmp.eq.f32.partialorder %v682, 0.0
    %vm698 = vcmp.eq.f32.partialorder %v684, 0.0
    %vm699 = vcmp.eq.f32.partialorder %v686, 0.0
    %vm700 = vcmp.eq.f32.partialorder %v688, 0.0
    %vm701 = vcmp.eq.f32.partialorder %v690, 0.0
    %vm702 = vcmp.eq.f32.partialorder %v692, 0.0
    %vm703 = vcmp.eq.f32.partialorder %v694, 0.0
    %vm704 = vcmp.eq.f32.partialorder %v696, 0.0
    %v705 = vsel %vm697, 1, 0
    %v706 = vsel %vm698, 1, 0
    %v707 = vsel %vm699, 1, 0
    %v708 = vsel %vm700, 1, 0
    %v709 = vsel %vm701, 1, 0
    %v710 = vsel %vm702, 1, 0
    %v711 = vsel %vm703, 1, 0
    %v712 = vsel %vm704, 1, 0
    %vm713 = vcmp.eq.s32.totalorder %v705, 1
    %vm714 = vcmp.eq.s32.totalorder %v706, 1
    %vm715 = vcmp.eq.s32.totalorder %v707, 1
    %vm716 = vcmp.eq.s32.totalorder %v708, 1
    %vm717 = vcmp.eq.s32.totalorder %v709, 1
    %vm718 = vcmp.eq.s32.totalorder %v710, 1
    %vm719 = vcmp.eq.s32.totalorder %v711, 1
    %vm720 = vcmp.eq.s32.totalorder %v712, 1
    %v721 = vsel %vm713, 0.0, %v665
    %v722 = vsel %vm714, 0.0, %v666
    %v723 = vsel %vm715, 0.0, %v667
    %v724 = vsel %vm716, 0.0, %v668
    %v725 = vsel %vm717, 0.0, %v669
    %v726 = vsel %vm718, 0.0, %v670
    %v727 = vsel %vm719, 0.0, %v671
    %v728 = vsel %vm720, 0.0, %v672
    %v729 = vmul.f32 %v237, %v237
    %v730 = vmul.f32 %v243, %v243
    %v731 = vmul.f32 %v249, %v249
    %v732 = vmul.f32 %v255, %v255
    %v733 = vmul.f32 %v261, %v261
    %v734 = vmul.f32 %v267, %v267
    %v735 = vmul.f32 %v273, %v273
    %v736 = vmul.f32 %v279, %v279
    %737 = vadd.xlane.f32.xlu0 %v729
    %v738 = vpop.xlane.xlu0 %737
    %739 = vadd.xlane.f32.xlu0 %v730
    %v740 = vpop.xlane.xlu0 %739
    %741 = vadd.xlane.f32.xlu0 %v731
    %v742 = vpop.xlane.xlu0 %741
    %743 = vadd.xlane.f32.xlu0 %v732
    %v744 = vpop.xlane.xlu0 %743
    %745 = vadd.xlane.f32.xlu0 %v733
    %v746 = vpop.xlane.xlu0 %745
    %747 = vadd.xlane.f32.xlu0 %v734
    %v748 = vpop.xlane.xlu0 %747
    %749 = vadd.xlane.f32.xlu0 %v735
    %v750 = vpop.xlane.xlu0 %749
    %751 = vadd.xlane.f32.xlu0 %v736
    %v752 = vpop.xlane.xlu0 %751
    %v753 = vrsqrt.pop %v738
    %v754 = vmul.f32 %v738, %v753
    %vm755 = vcmp.eq.f32.partialorder %v738, inf
    %v756 = vsel %vm755, %v738, %v754
    %vm757 = vcmp.eq.f32.partialorder %v738, 0.0
    %v758 = vand.u32 %v738, 2147483648
    %v759 = vsel %vm757, %v758, %v756
    %v760 = vrsqrt.pop %v740
    %v761 = vmul.f32 %v740, %v760
    %vm762 = vcmp.eq.f32.partialorder %v740, inf
    %v763 = vsel %vm762, %v740, %v761
    %vm764 = vcmp.eq.f32.partialorder %v740, 0.0
    %v765 = vand.u32 %v740, 2147483648
    %v766 = vsel %vm764, %v765, %v763
    %v767 = vrsqrt.pop %v742
    %v768 = vmul.f32 %v742, %v767
    %vm769 = vcmp.eq.f32.partialorder %v742, inf
    %v770 = vsel %vm769, %v742, %v768
    %vm771 = vcmp.eq.f32.partialorder %v742, 0.0
    %v772 = vand.u32 %v742, 2147483648
    %v773 = vsel %vm771, %v772, %v770
    %v774 = vrsqrt.pop %v744
    %v775 = vmul.f32 %v744, %v774
    %vm776 = vcmp.eq.f32.partialorder %v744, inf
    %v777 = vsel %vm776, %v744, %v775
    %vm778 = vcmp.eq.f32.partialorder %v744, 0.0
    %v779 = vand.u32 %v744, 2147483648
    %v780 = vsel %vm778, %v779, %v777
    %v781 = vrsqrt.pop %v746
    %v782 = vmul.f32 %v746, %v781
    %vm783 = vcmp.eq.f32.partialorder %v746, inf
    %v784 = vsel %vm783, %v746, %v782
    %vm785 = vcmp.eq.f32.partialorder %v746, 0.0
    %v786 = vand.u32 %v746, 2147483648
    %v787 = vsel %vm785, %v786, %v784
    %v788 = vrsqrt.pop %v748
    %v789 = vmul.f32 %v748, %v788
    %vm790 = vcmp.eq.f32.partialorder %v748, inf
    %v791 = vsel %vm790, %v748, %v789
    %vm792 = vcmp.eq.f32.partialorder %v748, 0.0
    %v793 = vand.u32 %v748, 2147483648
    %v794 = vsel %vm792, %v793, %v791
    %v795 = vrsqrt.pop %v750
    %v796 = vmul.f32 %v750, %v795
    %vm797 = vcmp.eq.f32.partialorder %v750, inf
    %v798 = vsel %vm797, %v750, %v796
    %vm799 = vcmp.eq.f32.partialorder %v750, 0.0
    %v800 = vand.u32 %v750, 2147483648
    %v801 = vsel %vm799, %v800, %v798
    %v802 = vrsqrt.pop %v752
    %v803 = vmul.f32 %v752, %v802
    %vm804 = vcmp.eq.f32.partialorder %v752, inf
    %v805 = vsel %vm804, %v752, %v803
    %vm806 = vcmp.eq.f32.partialorder %v752, 0.0
    %v807 = vand.u32 %v752, 2147483648
    %v808 = vsel %vm806, %v807, %v805
    %v809 = vmax.f32 %v759, 1e-15
    %v810 = vmax.f32 %v766, 1e-15
    %v811 = vmax.f32 %v773, 1e-15
    %v812 = vmax.f32 %v780, 1e-15
    %v813 = vmax.f32 %v787, 1e-15
    %v814 = vmax.f32 %v794, 1e-15
    %v815 = vmax.f32 %v801, 1e-15
    %v816 = vmax.f32 %v808, 1e-15
    %v817 = vmul.f32 %v809, %v369
    %v818 = vmul.f32 %v810, %v371
    %v819 = vmul.f32 %v811, %v373
    %v820 = vmul.f32 %v812, %v375
    %v821 = vmul.f32 %v813, %v377
    %v822 = vmul.f32 %v814, %v379
    %v823 = vmul.f32 %v815, %v381
    %v824 = vmul.f32 %v816, %v383
    %v825 = vmul.f32 %v817, %v561
    %v826 = vmul.f32 %v818, %v562
    %v827 = vmul.f32 %v819, %v563
    %v828 = vmul.f32 %v820, %v564
    %v829 = vmul.f32 %v821, %v565
    %v830 = vmul.f32 %v822, %v566
    %v831 = vmul.f32 %v823, %v567
    %v832 = vmul.f32 %v824, %v568
    %v833 = vtanh.pop %v825
    %v834 = vtanh.pop %v826
    %v835 = vtanh.pop %v827
    %v836 = vtanh.pop %v828
    %v837 = vtanh.pop %v829
    %v838 = vtanh.pop %v830
    %v839 = vtanh.pop %v831
    %v840 = vtanh.pop %v832
    %v841 = vrcp.pop %v809
    %v842 = vmul.f32 %v237, %v841
    %v843 = vrcp.pop %v810
    %v844 = vmul.f32 %v243, %v843
    %v845 = vrcp.pop %v811
    %v846 = vmul.f32 %v249, %v845
    %v847 = vrcp.pop %v812
    %v848 = vmul.f32 %v255, %v847
    %v849 = vrcp.pop %v813
    %v850 = vmul.f32 %v261, %v849
    %v851 = vrcp.pop %v814
    %v852 = vmul.f32 %v267, %v851
    %v853 = vrcp.pop %v815
    %v854 = vmul.f32 %v273, %v853
    %v855 = vrcp.pop %v816
    %v856 = vmul.f32 %v279, %v855
    %v857 = vmul.f32 %v833, %v842
    %v858 = vmul.f32 %v834, %v844
    %v859 = vmul.f32 %v835, %v846
    %v860 = vmul.f32 %v836, %v848
    %v861 = vmul.f32 %v837, %v850
    %v862 = vmul.f32 %v838, %v852
    %v863 = vmul.f32 %v839, %v854
    %v864 = vmul.f32 %v840, %v856
    %vm865 = vcmp.gt.f32.partialorder %v833, 0.996
    %vm866 = vcmp.gt.f32.partialorder %v834, 0.996
    %vm867 = vcmp.gt.f32.partialorder %v835, 0.996
    %vm868 = vcmp.gt.f32.partialorder %v836, 0.996
    %vm869 = vcmp.gt.f32.partialorder %v837, 0.996
    %vm870 = vcmp.gt.f32.partialorder %v838, 0.996
    %vm871 = vcmp.gt.f32.partialorder %v839, 0.996
    %vm872 = vcmp.gt.f32.partialorder %v840, 0.996
    %v873 = vmax.f32 %v833, 1e-15
    %v874 = vmax.f32 %v834, 1e-15
    %v875 = vmax.f32 %v835, 1e-15
    %v876 = vmax.f32 %v836, 1e-15
    %v877 = vmax.f32 %v837, 1e-15
    %v878 = vmax.f32 %v838, 1e-15
    %v879 = vmax.f32 %v839, 1e-15
    %v880 = vmax.f32 %v840, 1e-15
    %v881 = vrcp.pop %v873
    %v882 = vmul.f32 0.996, %v881
    %v883 = vrcp.pop %v874
    %v884 = vmul.f32 0.996, %v883
    %v885 = vrcp.pop %v875
    %v886 = vmul.f32 0.996, %v885
    %v887 = vrcp.pop %v876
    %v888 = vmul.f32 0.996, %v887
    %v889 = vrcp.pop %v877
    %v890 = vmul.f32 0.996, %v889
    %v891 = vrcp.pop %v878
    %v892 = vmul.f32 0.996, %v891
    %v893 = vrcp.pop %v879
    %v894 = vmul.f32 0.996, %v893
    %v895 = vrcp.pop %v880
    %v896 = vmul.f32 0.996, %v895
    %v897 = vmul.f32 %v857, %v882
    %v898 = vmul.f32 %v858, %v884
    %v899 = vmul.f32 %v859, %v886
    %v900 = vmul.f32 %v860, %v888
    %v901 = vmul.f32 %v861, %v890
    %v902 = vmul.f32 %v862, %v892
    %v903 = vmul.f32 %v863, %v894
    %v904 = vmul.f32 %v864, %v896
    %v905 = vsel %vm865, 1, 0
    %v906 = vsel %vm866, 1, 0
    %v907 = vsel %vm867, 1, 0
    %v908 = vsel %vm868, 1, 0
    %v909 = vsel %vm869, 1, 0
    %v910 = vsel %vm870, 1, 0
    %v911 = vsel %vm871, 1, 0
    %v912 = vsel %vm872, 1, 0
    %vm913 = vcmp.eq.s32.totalorder %v905, 1
    %vm914 = vcmp.eq.s32.totalorder %v906, 1
    %vm915 = vcmp.eq.s32.totalorder %v907, 1
    %vm916 = vcmp.eq.s32.totalorder %v908, 1
    %vm917 = vcmp.eq.s32.totalorder %v909, 1
    %vm918 = vcmp.eq.s32.totalorder %v910, 1
    %vm919 = vcmp.eq.s32.totalorder %v911, 1
    %vm920 = vcmp.eq.s32.totalorder %v912, 1
    %v921 = vsel %vm913, %v897, %v857
    %v922 = vsel %vm914, %v898, %v858
    %v923 = vsel %vm915, %v899, %v859
    %v924 = vsel %vm916, %v900, %v860
    %v925 = vsel %vm917, %v901, %v861
    %v926 = vsel %vm918, %v902, %v862
    %v927 = vsel %vm919, %v903, %v863
    %v928 = vsel %vm920, %v904, %v864
    %v929 = vand.u32 2147483647, %v237
    %v930 = vand.u32 2147483647, %v243
    %v931 = vand.u32 2147483647, %v249
    %v932 = vand.u32 2147483647, %v255
    %v933 = vand.u32 2147483647, %v261
    %v934 = vand.u32 2147483647, %v267
    %v935 = vand.u32 2147483647, %v273
    %v936 = vand.u32 2147483647, %v279
    %937 = vmax.xlane.f32.xlu0 %v929
    %v938 = vpop.xlane.xlu0 %937
    %939 = vmax.xlane.f32.xlu0 %v930
    %v940 = vpop.xlane.xlu0 %939
    %941 = vmax.xlane.f32.xlu0 %v931
    %v942 = vpop.xlane.xlu0 %941
    %943 = vmax.xlane.f32.xlu0 %v932
    %v944 = vpop.xlane.xlu0 %943
    %945 = vmax.xlane.f32.xlu0 %v933
    %v946 = vpop.xlane.xlu0 %945
    %947 = vmax.xlane.f32.xlu0 %v934
    %v948 = vpop.xlane.xlu0 %947
    %949 = vmax.xlane.f32.xlu0 %v935
    %v950 = vpop.xlane.xlu0 %949
    %951 = vmax.xlane.f32.xlu0 %v936
    %v952 = vpop.xlane.xlu0 %951
    %vm953 = vcmp.eq.f32.partialorder %v938, 0.0
    %vm954 = vcmp.eq.f32.partialorder %v940, 0.0
    %vm955 = vcmp.eq.f32.partialorder %v942, 0.0
    %vm956 = vcmp.eq.f32.partialorder %v944, 0.0
    %vm957 = vcmp.eq.f32.partialorder %v946, 0.0
    %vm958 = vcmp.eq.f32.partialorder %v948, 0.0
    %vm959 = vcmp.eq.f32.partialorder %v950, 0.0
    %vm960 = vcmp.eq.f32.partialorder %v952, 0.0
    %v961 = vsel %vm953, 1, 0
    %v962 = vsel %vm954, 1, 0
    %v963 = vsel %vm955, 1, 0
    %v964 = vsel %vm956, 1, 0
    %v965 = vsel %vm957, 1, 0
    %v966 = vsel %vm958, 1, 0
    %v967 = vsel %vm959, 1, 0
    %v968 = vsel %vm960, 1, 0
    %vm969 = vcmp.eq.s32.totalorder %v961, 1
    %vm970 = vcmp.eq.s32.totalorder %v962, 1
    %vm971 = vcmp.eq.s32.totalorder %v963, 1
    %vm972 = vcmp.eq.s32.totalorder %v964, 1
    %vm973 = vcmp.eq.s32.totalorder %v965, 1
    %vm974 = vcmp.eq.s32.totalorder %v966, 1
    %vm975 = vcmp.eq.s32.totalorder %v967, 1
    %vm976 = vcmp.eq.s32.totalorder %v968, 1
    %v977 = vsel %vm969, 0.0, %v921
    %v978 = vsel %vm970, 0.0, %v922
    %v979 = vsel %vm971, 0.0, %v923
    %v980 = vsel %vm972, 0.0, %v924
    %v981 = vsel %vm973, 0.0, %v925
    %v982 = vsel %vm974, 0.0, %v926
    %v983 = vsel %vm975, 0.0, %v927
    %v984 = vsel %vm976, 0.0, %v928
    %985 = vst [vmem:[#allocation7] sm:$0xff] %v721
    %986 = vst [vmem:[#allocation7 + $0x8] sm:$0xff] %v977
    %987 = vst [vmem:[#allocation7 + $0x10] sm:$0xff] %v722
    %988 = vst [vmem:[#allocation7 + $0x18] sm:$0xff] %v978
    %989 = vst [vmem:[#allocation7 + $0x20] sm:$0xff] %v723
    %990 = vst [vmem:[#allocation7 + $0x28] sm:$0xff] %v979
    %991 = vst [vmem:[#allocation7 + $0x30] sm:$0xff] %v724
    %992 = vst [vmem:[#allocation7 + $0x38] sm:$0xff] %v980
    %993 = vst [vmem:[#allocation7 + $0x40] sm:$0xff] %v725
    %994 = vst [vmem:[#allocation7 + $0x48] sm:$0xff] %v981
    %995 = vst [vmem:[#allocation7 + $0x50] sm:$0xff] %v726
    %996 = vst [vmem:[#allocation7 + $0x58] sm:$0xff] %v982
    %997 = vst [vmem:[#allocation7 + $0x60] sm:$0xff] %v727
    %998 = vst [vmem:[#allocation7 + $0x68] sm:$0xff] %v983
    %999 = vst [vmem:[#allocation7 + $0x70] sm:$0xff] %v728
    %1000 = vst [vmem:[#allocation7 + $0x78] sm:$0xff] %v984
    // Predicated region
    $region18: #{tpu_custom_call.1} parent=1 // pred_check
      _
    $region19: #{tpu_custom_call.1} parent=1 // pred_check_branch
      %1002 = sbr.rel (0) target = $region21
    $region20: #{tpu_custom_call.1} parent=1 // pred_region
      %s1004 = ssub.s32 2048, 2048
      %1005 = vsyncadd [#allocation4], %s1004
      %s1006 = sshll.u32 [#allocation7], 4
      %s1007 = int_to_ptr.vmem [resolvable:$true] %s1006
      %1012 = dma.vmem_to_hbm [thread:$0]  %s1007, 2048, %s2, [#allocation4], 256, 256, 16
    $region21: #{tpu_custom_call.1} parent=1 // pred_fallthru
      _
    // Predicated region
    $region22: #{tpu_custom_call.1} parent=1 // pred_check
      _
    $region23: #{tpu_custom_call.1} parent=1 // pred_check_branch
      %1014 = sbr.rel (0) target = $region25
    $region24: #{tpu_custom_call.1} parent=1 // pred_region
      %1015 = dma.done [#allocation4], 2048
    $region25: #{tpu_custom_call.1} parent=1 // pred_fallthru
      _
    %1016 = vsyncpa [#allocation3], 1
    %1017 = vsyncpa [#allocation6], 1
    %1018 = vsyncpa [#allocation4], 1

</llo_original>
